<compile_context>
chip_gen: v5e
topology: v5e:2x2
jax: 0.10.0
libtpu: 0.0.40
codegen_flags: <defaults>
</compile_context>

<pallas_src>
import math
from functools import partial

import jax
import jax.numpy as jnp
from jax.experimental import pallas as pl
from jax.experimental.pallas import tpu as pltpu


def _conv_pad(kernel_size, dilation=1):
    # Matches conv_with_padding in the PyTorch reference.
    eff = (kernel_size - 1) * dilation + 1
    return (eff - 1) // 2 + int((eff - 1) % 2 > 0)


def _round_up8(v):
    return (v + 7) // 8 * 8


# ------------------------------ fused kernel --------------------------------

def _basic_block_kernel(*refs, L, K, stride, dilation, pad, L_mid, L_out,
                        has_downsample):
    if has_downsample:
        (x_ref, w1_ref, s1_ref, w2_ref, s2_ref, wd_ref, sd_ref,
         o_ref, im1, mid, im2) = refs
    else:
        (x_ref, w1_ref, s1_ref, w2_ref, s2_ref,
         o_ref, im1, mid, im2) = refs

    Cin = x_ref.shape[-1]
    Cout = o_ref.shape[-1]

    def fill_im2col(dst, loader, C, L_src, n_rows, conv_stride):
        """dst: (M_r, K*C) bf16 scratch.  Column block k, output row o holds
        source row o*conv_stride + k*dilation - pad (zero where out of range).
        All offsets/sizes are static; only the pad-edge rows are zero-filled."""
        M_r = dst.shape[0]
        for k in range(K):
            off = k * dilation - pad
            o_start = min(max(0, -(off // conv_stride)), n_rows)
            o_end = min(n_rows, (L_src - 1 - off) // conv_stride + 1)
            o_end = max(o_end, o_start)
            parts = []
            if o_start > 0:
                parts.append(jnp.zeros((o_start, C), jnp.float32))
            if o_end > o_start:
                parts.append(loader(o_start * conv_stride + off, o_end - o_start))
            if M_r > o_end:
                parts.append(jnp.zeros((M_r - o_end, C), jnp.float32))
            col = parts[0] if len(parts) == 1 else jnp.concatenate(parts, axis=0)
            # single bf16 cast fused into the (unavoidable) im2col copy; full-row,
            # static-lane-offset store.
            dst[:, pl.ds(k * C, C)] = col.astype(dst.dtype)

    # ---- conv1 + folded BN1 + ReLU (stride-aware: only L_mid rows computed) ----
    if stride == 1:
        x_loader = lambda s0, n: x_ref[pl.ds(s0, n), :]
    else:
        x_loader = lambda s0, n: x_ref[pl.ds(s0, n, stride), :]
    fill_im2col(im1, x_loader, Cin, L, L_mid, stride)
    h1 = jnp.dot(im1[...], w1_ref[...], preferred_element_type=jnp.float32)
    mid[...] = jnp.maximum(h1 + s1_ref[...], 0.0)          # f32, fully overwritten

    # ---- conv2 + folded BN2 (stride 1) -----------------------------------------
    mv = mid[...]                                           # one aligned full read
    fill_im2col(im2, lambda s0, n: mv[s0:s0 + n], Cout, L_mid, L_out, 1)
    h2 = jnp.dot(im2[...], w2_ref[...], preferred_element_type=jnp.float32)
    out = h2[0:L_out, :] + s2_ref[...]

    # ---- residual branch: fused 1x1 strided conv + folded BN -------------------
    if has_downsample:
        if stride == 1:
            xs = x_ref[pl.ds(0, L_out), :]
        else:
            xs = x_ref[pl.ds(0, L_out, stride), :]
        ident = jnp.dot(xs.astype(jnp.bfloat16), wd_ref[...],
                        preferred_element_type=jnp.float32) + sd_ref[...]
    else:
        ident = x_ref[...]                  # stride == 1 and Cin == Cout here

    # ---- add identity + ReLU + lane-dense store ---------------------------------
    o_ref[...] = jnp.maximum(out + ident, 0.0).astype(o_ref.dtype)


# -------------------------------- wrappers ------------------------------------

def basic_block_forward_nlc(x_nlc, params):
    """Fused BasicBlock forward, channels-last. x_nlc: (N, L, Cin) float32.
    Returns (N, L_out, Cout) float32 (channels-last, chainable without transposes)."""
    N, L, Cin = x_nlc.shape
    K = params['kernel_size']
    stride = params['stride']
    dil = params['dilation']
    Cout = params['planes']
    assert params['w1'].shape == (K * Cin, Cout), "packed weight shape mismatch"
    pad = _conv_pad(K, dil)
    L_mid = (L + 2 * pad - dil * (K - 1) - 1) // stride + 1
    L_out = L_mid + 2 * pad - dil * (K - 1)               # conv2 has stride 1
    has_down = 'wd' in params
    if has_down:
        assert (L - 1) // stride + 1 == L_out, "downsample/conv length mismatch"
    else:
        assert stride == 1 and Cin == Cout and L_out == L, \
            "identity residual requires matching shapes"

    M1r = _round_up8(L_mid)
    M2r = _round_up8(L_out)

    def bcast(shape):                        # resident (constant-index) block
        return pl.BlockSpec(shape, lambda n: (0,) * len(shape))

    in_specs = [pl.BlockSpec((None, L, Cin), lambda n: (n, 0, 0)),
                bcast((K * Cin, Cout)), bcast((1, Cout)),
                bcast((K * Cout, Cout)), bcast((1, Cout))]
    args = [x_nlc.astype(jnp.float32), params['w1'], params['s1'],
            params['w2'], params['s2']]
    if has_down:
        in_specs += [bcast((Cin, Cout)), bcast((1, Cout))]
        args += [params['wd'], params['sd']]

    scratch = [pltpu.VMEM((M1r, K * Cin), jnp.bfloat16),   # conv1 im2col slab
               pltpu.VMEM((M1r, Cout), jnp.float32),       # relu(bn1(conv1)) rows
               pltpu.VMEM((M2r, K * Cout), jnp.bfloat16)]  # conv2 im2col slab

    kern = partial(_basic_block_kernel, L=L, K=K, stride=stride, dilation=dil,
                   pad=pad, L_mid=L_mid, L_out=L_out, has_downsample=has_down)

    return pl.pallas_call(
        kern,
        out_shape=jax.ShapeDtypeStruct((N, L_out, Cout), jnp.float32),
        grid=(N,),                           # per-batch pipelining; v7x: 2 TCs
        in_specs=in_specs,
        out_specs=pl.BlockSpec((None, L_out, Cout), lambda n: (n, 0, 0)),
        scratch_shapes=scratch,
        compiler_params=pltpu.CompilerParams(
            dimension_semantics=("parallel",),
            # explicit limit (v5e default is 16 MiB); <= ~48 MiB leaves headroom
            # on v7x's 64 MiB physical VMEM.
            vmem_limit_bytes=48 * 1024 * 1024),
    )(*args)


def basic_block_forward(x_ncl, params):
    """PyTorch-layout wrapper: (N, Cin, L) -> (N, Cout, L_out).  Prefer chaining
    blocks with basic_block_forward_nlc to avoid per-block transposes."""
    y = basic_block_forward_nlc(jnp.transpose(x_ncl, (0, 2, 1)), params)
    return jnp.transpose(y, (0, 2, 1))


# --------------------------- parameter building ------------------------------

def init_basic_block_params(key, inplanes, planes, *, stride=1, kernel_size=3,
                            dilation=1, eps=1e-5):
    """BasicBlock params with eval-mode BN folded into im2col-packed bf16 weights."""
    k1, k2, k3 = jax.random.split(key, 3)

    def conv_w(k, cout, cin, ksz):
        std = math.sqrt(2.0 / (cout * ksz))                  # kaiming fan_out
        w = jax.random.normal(k, (cout, cin, ksz), jnp.float32) * std
        return jnp.transpose(w, (2, 1, 0))                   # (K, Cin, Cout)

    def bn_fold(c):
        gamma = jnp.ones((c,), jnp.float32)
        beta = jnp.zeros((c,), jnp.float32)
        mean = jnp.zeros((c,), jnp.float32)
        var = jnp.ones((c,), jnp.float32)
        scale = gamma / jnp.sqrt(var + eps)
        shift = beta - mean * scale
        return scale, shift

    p = {'stride': stride, 'dilation': dilation, 'kernel_size': kernel_size,
         'inplanes': inplanes, 'planes': planes}
    sc1, sh1 = bn_fold(planes)
    w1 = conv_w(k1, planes, inplanes, kernel_size) * sc1[None, None, :]
    p['w1'] = w1.reshape(kernel_size * inplanes, planes).astype(jnp.bfloat16)
    p['s1'] = sh1.reshape(1, planes).astype(jnp.float32)
    sc2, sh2 = bn_fold(planes)
    w2 = conv_w(k2, planes, planes, kernel_size) * sc2[None, None, :]
    p['w2'] = w2.reshape(kernel_size * planes, planes).astype(jnp.bfloat16)
    p['s2'] = sh2.reshape(1, planes).astype(jnp.float32)
    if stride != 1 or inplanes != planes:
        scd, shd = bn_fold(planes)
        wd = conv_w(k3, planes, inplanes, 1)[0] * scd[None, :]   # (Cin, Cout)
        p['wd'] = wd.astype(jnp.bfloat16)
        p['sd'] = shd.reshape(1, planes).astype(jnp.float32)
    return p


# ------------------------------ JAX reference ---------------------------------

def _ref_conv1d(x_ncl, w_kio, *, stride, padding, dilation):
    w_oik = jnp.transpose(w_kio.astype(jnp.float32), (2, 1, 0))   # (Cout, Cin, K)
    return jax.lax.conv_general_dilated(
        x_ncl, w_oik, window_strides=(stride,), padding=[(padding, padding)],
        rhs_dilation=(dilation,), dimension_numbers=("NCH", "OIH", "NCH"))


def _ref_basic_block(x_ncl, p):
    K, Cin, Cout = p['kernel_size'], p['inplanes'], p['planes']
    pad = _conv_pad(K, p['dilation'])
    w1 = p['w1'].reshape(K, Cin, Cout)
    w2 = p['w2'].reshape(K, Cout, Cout)
    s1 = p['s1'].reshape(1, -1, 1)
    s2 = p['s2'].reshape(1, -1, 1)
    out = jax.nn.relu(_ref_conv1d(x_ncl, w1, stride=p['stride'],
                                  padding=pad, dilation=p['dilation']) + s1)
    out = _ref_conv1d(out, w2, stride=1, padding=pad,
                      dilation=p['dilation']) + s2
    if 'wd' in p:
        ident = _ref_conv1d(x_ncl, p['wd'][None], stride=p['stride'],
                            padding=0, dilation=1) + p['sd'].reshape(1, -1, 1)
    else:
        ident = x_ncl
    return jax.nn.relu(out + ident)


# ---------------------------------- main ---------------------------------------

if __name__ == "__main__":
    key = jax.random.PRNGKey(0)
    kx, ka, kb = jax.random.split(key, 3)

    # Block A: 64 -> 128 channels, stride 2 (exercises the fused downsample path).
    pA = init_basic_block_params(ka, 64, 128, stride=2)
    # Block B: 128 -> 128, stride 1 (pure identity residual path).
    pB = init_basic_block_params(kb, 128, 128, stride=1)

    x_ncl = jax.random.normal(kx, (2, 64, 32), jnp.float32)   # (N, Cin, L) PyTorch layout

    # Channels-last once at model entry; chain blocks without per-block transposes.
    x_nlc = jnp.transpose(x_ncl, (0, 2, 1))
    y1_nlc = basic_block_forward_nlc(x_nlc, pA)
    y2_nlc = basic_block_forward_nlc(y1_nlc, pB)
    y1_nlc, y2_nlc = jax.block_until_ready((y1_nlc, y2_nlc))

    assert y1_nlc.shape == (2, 16, 128), y1_nlc.shape
    assert y2_nlc.shape == (2, 16, 128), y2_nlc.shape
    assert bool(jnp.all(jnp.isfinite(y2_nlc)))

    # Numerical check against a pure-JAX reference (bf16 matmul tolerance).
    r1 = _ref_basic_block(x_ncl, pA)
    r2 = _ref_basic_block(r1, pB)
    y1 = jnp.transpose(y1_nlc, (0, 2, 1))
    y2 = jnp.transpose(y2_nlc, (0, 2, 1))
    assert jnp.allclose(y1, r1, rtol=1e-1, atol=1e-1), float(jnp.max(jnp.abs(y1 - r1)))
    assert jnp.allclose(y2, r2, rtol=1e-1, atol=1e-1), float(jnp.max(jnp.abs(y2 - r2)))

    print("KERNEL_OK")
</pallas_src>

<mosaic_0001>
module attributes {stable_mosaic.version = 11 : i64} {
  func.func @_basic_block_kernel(%arg0: i32, %arg1: memref<1x32x64xf32, #tpu.memory_space<vmem>>, %arg2: memref<192x128xbf16, #tpu.memory_space<vmem>>, %arg3: memref<1x128xf32, #tpu.memory_space<vmem>>, %arg4: memref<384x128xbf16, #tpu.memory_space<vmem>>, %arg5: memref<1x128xf32, #tpu.memory_space<vmem>>, %arg6: memref<64x128xbf16, #tpu.memory_space<vmem>>, %arg7: memref<1x128xf32, #tpu.memory_space<vmem>>, %arg8: memref<1x16x128xf32, #tpu.memory_space<vmem>>, %arg9: memref<16x192xbf16, #tpu.memory_space<vmem>>, %arg10: memref<16x128xf32, #tpu.memory_space<vmem>>, %arg11: memref<16x384xbf16, #tpu.memory_space<vmem>>) attributes {dimension_semantics = [#tpu.dimension_semantics<parallel>], iteration_bounds = array<i64: 2>, scalar_prefetch = 0 : i64, scratch_operands = 3 : i64, tpu.core_type = #tpu.core_type<tc>, window_params = [{transform_indices = @transform_0, window_bounds = array<i64: 1, 32, 64>}, {pipeline_mode = #tpu.pipeline_mode<synchronous>, transform_indices = @transform_1, window_bounds = array<i64: 192, 128>}, {pipeline_mode = #tpu.pipeline_mode<synchronous>, transform_indices = @transform_2, window_bounds = array<i64: 1, 128>}, {pipeline_mode = #tpu.pipeline_mode<synchronous>, transform_indices = @transform_3, window_bounds = array<i64: 384, 128>}, {pipeline_mode = #tpu.pipeline_mode<synchronous>, transform_indices = @transform_4, window_bounds = array<i64: 1, 128>}, {pipeline_mode = #tpu.pipeline_mode<synchronous>, transform_indices = @transform_5, window_bounds = array<i64: 64, 128>}, {pipeline_mode = #tpu.pipeline_mode<synchronous>, transform_indices = @transform_6, window_bounds = array<i64: 1, 128>}, {transform_indices = @transform_7, window_bounds = array<i64: 1, 16, 128>}]} {
    %cst = arith.constant 0.000000e+00 : f32
    %0 = vector.broadcast %cst : f32 to vector<1x64xf32>
    %c0 = arith.constant 0 : index
    %c1 = arith.constant 1 : index
    %c0_0 = arith.constant 0 : index
    %1 = tpu.strided_load %arg1[%c0, %c1, %c0_0] {strides = array<i32: 1, 2, 1>} : memref<1x32x64xf32, #tpu.memory_space<vmem>>, vector<1x15x64xf32>
    %2 = vector.shape_cast %1 : vector<1x15x64xf32> to vector<15x64xf32>
    %3 = tpu.concatenate %0, %2 in 0 : vector<1x64xf32>, vector<15x64xf32> -> vector<16x64xf32>
    %4 = arith.truncf %3 : vector<16x64xf32> to vector<16x64xbf16>
    %c0_1 = arith.constant 0 : index
    %c0_2 = arith.constant 0 : index
    %5 = vector.load %arg9[%c0_1, %c0_2] : memref<16x192xbf16, #tpu.memory_space<vmem>>, vector<16x64xbf16>
    tpu.vector_store %arg9[%c0_1, %c0_2], %4 {strides = array<i32>} : memref<16x192xbf16, #tpu.memory_space<vmem>>, vector<16x64xbf16>,
    %c0_3 = arith.constant 0 : index
    %c0_4 = arith.constant 0 : index
    %c0_5 = arith.constant 0 : index
    %6 = tpu.strided_load %arg1[%c0_3, %c0_4, %c0_5] {strides = array<i32: 1, 2, 1>} : memref<1x32x64xf32, #tpu.memory_space<vmem>>, vector<1x16x64xf32>
    %7 = vector.shape_cast %6 : vector<1x16x64xf32> to vector<16x64xf32>
    %8 = arith.truncf %7 : vector<16x64xf32> to vector<16x64xbf16>
    %c0_6 = arith.constant 0 : index
    %c64 = arith.constant 64 : index
    %9 = vector.load %arg9[%c0_6, %c64] : memref<16x192xbf16, #tpu.memory_space<vmem>>, vector<16x64xbf16>
    tpu.vector_store %arg9[%c0_6, %c64], %8 {strides = array<i32>} : memref<16x192xbf16, #tpu.memory_space<vmem>>, vector<16x64xbf16>,
    %c0_7 = arith.constant 0 : index
    %c1_8 = arith.constant 1 : index
    %c0_9 = arith.constant 0 : index
    %10 = tpu.strided_load %arg1[%c0_7, %c1_8, %c0_9] {strides = array<i32: 1, 2, 1>} : memref<1x32x64xf32, #tpu.memory_space<vmem>>, vector<1x16x64xf32>
    %11 = vector.shape_cast %10 : vector<1x16x64xf32> to vector<16x64xf32>
    %12 = arith.truncf %11 : vector<16x64xf32> to vector<16x64xbf16>
    %c0_10 = arith.constant 0 : index
    %c128 = arith.constant 128 : index
    %13 = vector.load %arg9[%c0_10, %c128] : memref<16x192xbf16, #tpu.memory_space<vmem>>, vector<16x64xbf16>
    tpu.vector_store %arg9[%c0_10, %c128], %12 {strides = array<i32>} : memref<16x192xbf16, #tpu.memory_space<vmem>>, vector<16x64xbf16>,
    %c0_11 = arith.constant 0 : index
    %c0_12 = arith.constant 0 : index
    %14 = vector.load %arg9[%c0_11, %c0_12] : memref<16x192xbf16, #tpu.memory_space<vmem>>, vector<16x192xbf16>
    %c0_13 = arith.constant 0 : index
    %c0_14 = arith.constant 0 : index
    %15 = vector.load %arg2[%c0_13, %c0_14] : memref<192x128xbf16, #tpu.memory_space<vmem>>, vector<192x128xbf16>
    %cst_15 = arith.constant dense<0.000000e+00> : vector<16x128xf32>
    %16 = tpu.matmul %14, %15, %cst_15 {dimension_numbers = #tpu.dot_dimension_numbers<[1], [0], [0], [1], [0, 0, 1, 1], [], []>} : vector<16x192xbf16>, vector<192x128xbf16>, vector<16x128xf32> -> vector<16x128xf32>
    %c0_16 = arith.constant 0 : index
    %c0_17 = arith.constant 0 : index
    %17 = vector.load %arg3[%c0_16, %c0_17] : memref<1x128xf32, #tpu.memory_space<vmem>>, vector<1x128xf32>
    %18 = vector.broadcast %17 : vector<1x128xf32> to vector<16x128xf32>
    %19 = arith.addf %16, %18 : vector<16x128xf32>
    %cst_18 = arith.constant 0.000000e+00 : f32
    %20 = vector.broadcast %cst_18 : f32 to vector<16x128xf32>
    %21 = arith.maximumf %19, %20 : vector<16x128xf32>
    %c0_19 = arith.constant 0 : index
    %c0_20 = arith.constant 0 : index
    %22 = vector.load %arg10[%c0_19, %c0_20] : memref<16x128xf32, #tpu.memory_space<vmem>>, vector<16x128xf32>
    tpu.vector_store %arg10[%c0_19, %c0_20], %21 {strides = array<i32>} : memref<16x128xf32, #tpu.memory_space<vmem>>, vector<16x128xf32>,
    %c0_21 = arith.constant 0 : index
    %c0_22 = arith.constant 0 : index
    %23 = vector.load %arg10[%c0_21, %c0_22] : memref<16x128xf32, #tpu.memory_space<vmem>>, vector<16x128xf32>
    %cst_23 = arith.constant 0.000000e+00 : f32
    %24 = vector.broadcast %cst_23 : f32 to vector<1x128xf32>
    %25 = vector.extract_strided_slice %23 {offsets = [0, 0], sizes = [15, 128], strides = [1, 1]} : vector<16x128xf32> to vector<15x128xf32>
    %26 = tpu.concatenate %24, %25 in 0 : vector<1x128xf32>, vector<15x128xf32> -> vector<16x128xf32>
    %27 = arith.truncf %26 : vector<16x128xf32> to vector<16x128xbf16>
    %c0_24 = arith.constant 0 : index
    %c0_25 = arith.constant 0 : index
    %28 = vector.load %arg11[%c0_24, %c0_25] : memref<16x384xbf16, #tpu.memory_space<vmem>>, vector<16x128xbf16>
    tpu.vector_store %arg11[%c0_24, %c0_25], %27 {strides = array<i32>} : memref<16x384xbf16, #tpu.memory_space<vmem>>, vector<16x128xbf16>,
    %29 = arith.truncf %23 : vector<16x128xf32> to vector<16x128xbf16>
    %c0_26 = arith.constant 0 : index
    %c128_27 = arith.constant 128 : index
    %30 = vector.load %arg11[%c0_26, %c128_27] : memref<16x384xbf16, #tpu.memory_space<vmem>>, vector<16x128xbf16>
    tpu.vector_store %arg11[%c0_26, %c128_27], %29 {strides = array<i32>} : memref<16x384xbf16, #tpu.memory_space<vmem>>, vector<16x128xbf16>,
    %31 = vector.extract_strided_slice %23 {offsets = [1, 0], sizes = [15, 128], strides = [1, 1]} : vector<16x128xf32> to vector<15x128xf32>
    %cst_28 = arith.constant 0.000000e+00 : f32
    %32 = vector.broadcast %cst_28 : f32 to vector<1x128xf32>
    %33 = tpu.concatenate %31, %32 in 0 : vector<15x128xf32>, vector<1x128xf32> -> vector<16x128xf32>
    %34 = arith.truncf %33 : vector<16x128xf32> to vector<16x128xbf16>
    %c0_29 = arith.constant 0 : index
    %c256 = arith.constant 256 : index
    %35 = vector.load %arg11[%c0_29, %c256] : memref<16x384xbf16, #tpu.memory_space<vmem>>, vector<16x128xbf16>
    tpu.vector_store %arg11[%c0_29, %c256], %34 {strides = array<i32>} : memref<16x384xbf16, #tpu.memory_space<vmem>>, vector<16x128xbf16>,
    %c0_30 = arith.constant 0 : index
    %c0_31 = arith.constant 0 : index
    %36 = vector.load %arg11[%c0_30, %c0_31] : memref<16x384xbf16, #tpu.memory_space<vmem>>, vector<16x384xbf16>
    %c0_32 = arith.constant 0 : index
    %c0_33 = arith.constant 0 : index
    %37 = vector.load %arg4[%c0_32, %c0_33] : memref<384x128xbf16, #tpu.memory_space<vmem>>, vector<384x128xbf16>
    %cst_34 = arith.constant dense<0.000000e+00> : vector<16x128xf32>
    %38 = tpu.matmul %36, %37, %cst_34 {dimension_numbers = #tpu.dot_dimension_numbers<[1], [0], [0], [1], [0, 0, 1, 1], [], []>} : vector<16x384xbf16>, vector<384x128xbf16>, vector<16x128xf32> -> vector<16x128xf32>
    %c0_35 = arith.constant 0 : index
    %c0_36 = arith.constant 0 : index
    %39 = vector.load %arg5[%c0_35, %c0_36] : memref<1x128xf32, #tpu.memory_space<vmem>>, vector<1x128xf32>
    %40 = vector.broadcast %39 : vector<1x128xf32> to vector<16x128xf32>
    %41 = arith.addf %38, %40 : vector<16x128xf32>
    %c0_37 = arith.constant 0 : index
    %c0_38 = arith.constant 0 : index
    %c0_39 = arith.constant 0 : index
    %42 = tpu.strided_load %arg1[%c0_37, %c0_38, %c0_39] {strides = array<i32: 1, 2, 1>} : memref<1x32x64xf32, #tpu.memory_space<vmem>>, vector<1x16x64xf32>
    %43 = vector.shape_cast %42 : vector<1x16x64xf32> to vector<16x64xf32>
    %44 = arith.truncf %43 : vector<16x64xf32> to vector<16x64xbf16>
    %c0_40 = arith.constant 0 : index
    %c0_41 = arith.constant 0 : index
    %45 = vector.load %arg6[%c0_40, %c0_41] : memref<64x128xbf16, #tpu.memory_space<vmem>>, vector<64x128xbf16>
    %cst_42 = arith.constant dense<0.000000e+00> : vector<16x128xf32>
    %46 = tpu.matmul %44, %45, %cst_42 {dimension_numbers = #tpu.dot_dimension_numbers<[1], [0], [0], [1], [0, 0, 1, 1], [], []>} : vector<16x64xbf16>, vector<64x128xbf16>, vector<16x128xf32> -> vector<16x128xf32>
    %c0_43 = arith.constant 0 : index
    %c0_44 = arith.constant 0 : index
    %47 = vector.load %arg7[%c0_43, %c0_44] : memref<1x128xf32, #tpu.memory_space<vmem>>, vector<1x128xf32>
    %48 = vector.broadcast %47 : vector<1x128xf32> to vector<16x128xf32>
    %49 = arith.addf %46, %48 : vector<16x128xf32>
    %50 = arith.addf %41, %49 : vector<16x128xf32>
    %cst_45 = arith.constant 0.000000e+00 : f32
    %51 = vector.broadcast %cst_45 : f32 to vector<16x128xf32>
    %52 = arith.maximumf %50, %51 : vector<16x128xf32>
    %c0_46 = arith.constant 0 : index
    %c0_47 = arith.constant 0 : index
    %c0_48 = arith.constant 0 : index
    %53 = vector.load %arg8[%c0_46, %c0_47, %c0_48] : memref<1x16x128xf32, #tpu.memory_space<vmem>>, vector<1x16x128xf32>
    %54 = vector.shape_cast %53 : vector<1x16x128xf32> to vector<16x128xf32>
    %55 = vector.shape_cast %52 : vector<16x128xf32> to vector<1x16x128xf32>
    tpu.vector_store %arg8[%c0_46, %c0_47, %c0_48], %55 {strides = array<i32>} : memref<1x16x128xf32, #tpu.memory_space<vmem>>, vector<1x16x128xf32>,
    return
  }
  func.func @transform_0(%arg0: i32) -> (i32, i32, i32) {
    %c0_i32 = arith.constant 0 : i32
    %c0_i32_0 = arith.constant 0 : i32
    %c0_i32_1 = arith.constant 0 : i32
    return %arg0, %c0_i32, %c0_i32_0 : i32, i32, i32
  }
  func.func @transform_1(%arg0: i32) -> (i32, i32) {
    %c0_i32 = arith.constant 0 : i32
    %c0_i32_0 = arith.constant 0 : i32
    %c0_i32_1 = arith.constant 0 : i32
    return %c0_i32, %c0_i32_0 : i32, i32
  }
  func.func @transform_2(%arg0: i32) -> (i32, i32) {
    %c0_i32 = arith.constant 0 : i32
    %c0_i32_0 = arith.constant 0 : i32
    %c0_i32_1 = arith.constant 0 : i32
    return %c0_i32, %c0_i32_0 : i32, i32
  }
  func.func @transform_3(%arg0: i32) -> (i32, i32) {
    %c0_i32 = arith.constant 0 : i32
    %c0_i32_0 = arith.constant 0 : i32
    %c0_i32_1 = arith.constant 0 : i32
    return %c0_i32, %c0_i32_0 : i32, i32
  }
  func.func @transform_4(%arg0: i32) -> (i32, i32) {
    %c0_i32 = arith.constant 0 : i32
    %c0_i32_0 = arith.constant 0 : i32
    %c0_i32_1 = arith.constant 0 : i32
    return %c0_i32, %c0_i32_0 : i32, i32
  }
  func.func @transform_5(%arg0: i32) -> (i32, i32) {
    %c0_i32 = arith.constant 0 : i32
    %c0_i32_0 = arith.constant 0 : i32
    %c0_i32_1 = arith.constant 0 : i32
    return %c0_i32, %c0_i32_0 : i32, i32
  }
  func.func @transform_6(%arg0: i32) -> (i32, i32) {
    %c0_i32 = arith.constant 0 : i32
    %c0_i32_0 = arith.constant 0 : i32
    %c0_i32_1 = arith.constant 0 : i32
    return %c0_i32, %c0_i32_0 : i32, i32
  }
  func.func @transform_7(%arg0: i32) -> (i32, i32, i32) {
    %c0_i32 = arith.constant 0 : i32
    %c0_i32_0 = arith.constant 0 : i32
    %c0_i32_1 = arith.constant 0 : i32
    return %arg0, %c0_i32, %c0_i32_0 : i32, i32, i32
  }
}

</mosaic_0001>

<llo_original>
// kernel: tpu_custom_call.1
$region0: #{tpu_custom_call.1}
  #allocation0 [shape = 'u32[]', space=smem, size = 0x4, offset = 0x4, fixed_abs, tag = 'smem constant byte address 0x4 - core index']
  #allocation1 [shape = 'u32[72,128]{1,0:T(1,128)}', space=vmem, size = 0x9000, scoped, tag = 'internal scratch']
  #allocation2 [shape = 'bf16[16,192]{1,0:T(8,128)(2,1)}', space=vmem, size = 0x2000, scoped, tag = 'scratch operand']
  #allocation3 [shape = 'f32[16,128]{1,0:T(8,128)}', space=vmem, size = 0x2000, scoped, tag = 'scratch operand']
  #allocation4 [shape = 'bf16[16,384]{1,0:T(8,128)(2,1)}', space=vmem, size = 0x3000, scoped, tag = 'scratch operand']
  %s0 = inlined_call_operand.hbm [shape: f32[2,32,64], index: 0, kind: input, shape index: {}]
  %s1 = inlined_call_operand.hbm [shape: bf16[192,128], index: 1, kind: input, shape index: {}]
  %s2 = inlined_call_operand.vmem [shape: f32[1,128], index: 2, kind: input, shape index: {}]
  %s3 = inlined_call_operand.hbm [shape: bf16[384,128], index: 3, kind: input, shape index: {}]
  %s4 = inlined_call_operand.vmem [shape: f32[1,128], index: 4, kind: input, shape index: {}]
  %s5 = inlined_call_operand.hbm [shape: bf16[64,128], index: 5, kind: input, shape index: {}]
  %s6 = inlined_call_operand.vmem [shape: f32[1,128], index: 6, kind: input, shape index: {}]
  %s7 = inlined_call_operand.hbm [shape: f32[2,16,128], index: 7, kind: output, shape index: {}]
  %s8 = sld [smem:[#allocation0]]
  $region77: #{tpu_custom_call.1} parent=0
    _
  %s10 = ssub.s32 1, %s8
  %s11 = scalar_select 0, %s10, %s8
  $region1: #{tpu_custom_call.1} parent=0
    #allocation5 [shape = 'u8[32768]{0}', space=vmem, size = 0x8000, scoped, tag = 'input window, operand 0']
    #allocation6 [shape = 's32[2]{0}', space=sflag, size = 0x8, scoped, tag = 'scoped memory for tpu_custom_call.1']
    #allocation7 [shape = 's32[2]{0}', space=sflag, size = 0x8, scoped, tag = 'scoped memory for tpu_custom_call.1']
    #allocation8 [shape = 'u8[49152]{0}', space=vmem, size = 0xc000, scoped, tag = 'input window, operand 1, single buffered']
    #allocation9 [shape = 's32[1]{0}', space=sflag, size = 0x4, scoped, tag = 'scoped memory for tpu_custom_call.1']
    #allocation10 [shape = 'u8[98304]{0}', space=vmem, size = 0x18000, scoped, tag = 'input window, operand 3, single buffered']
    #allocation11 [shape = 'u8[16384]{0}', space=vmem, size = 0x4000, scoped, tag = 'input window, operand 5, single buffered']
    #allocation12 [shape = 's32[1]{0}', space=sflag, size = 0x4, scoped, tag = 'scoped memory for tpu_custom_call.1']
    #allocation13 [shape = 'u8[16384]{0}', space=vmem, size = 0x4000, scoped, tag = 'output window, operand 0']
    %12 = vsyncpa [#allocation6], 0
    %s13 = scalar_lea.sflag [#allocation6], 1
    %14 = vsyncpa %s13, 0
    %15 = vsyncpa [#allocation9], 0
    %16 = vsyncpa [#allocation12], 0
    %17 = vsyncpa [#allocation7], 0
    %s18 = scalar_lea.sflag [#allocation7], 1
    %19 = vsyncpa %s18, 0
    loop: start=0, step=1, limit=4
    $region2: #{tpu_custom_call.1} parent=1 // loop_pre_header
      _
    $region3: #{tpu_custom_call.1} parent=1 // loop_header
      %s21 = sphi 0, %s25
      %p22 = scmp.ge.s32.totalorder %s21, 4
      %s31 = sphi 0, %s33
      %s34 = sphi 0, %s31
      %s35 = sphi 0, %s34
      %s51 = sphi 0, %s35
      %s55 = sphi 0, %s55
      %s57 = sphi 0, %s55
      %s58 = sphi 0, %s57
      %s72 = sphi 0, %s58
      %s76 = sphi 0, %s76
      %s78 = sphi 0, %s76
      %s79 = sphi 0, %s78
      %s93 = sphi 0, %s79
      %s97 = sphi 0, %s97
      %s99 = sphi 0, %s97
      %s100 = sphi 0, %s99
      %s114 = sphi 0, %s100
      %s118 = sphi 0, %s118
      %s120 = sphi 0, %s118
      %s121 = sphi 0, %s120
      %s135 = sphi 0, %s121
      %s139 = sphi 0, %s139
      %s141 = sphi 0, %s139
      %s142 = sphi 0, %s141
      %s156 = sphi 0, %s142
      %s160 = sphi 0, %s160
      %s162 = sphi 0, %s160
      %s163 = sphi 0, %s162
      %s177 = sphi 0, %s163
      %s183 = sphi 0, %s185
      %s186 = sphi 0, %s183
      %s187 = sphi 0, %s186
      %s203 = sphi 0, %s187
    $region4: #{tpu_custom_call.1} parent=1 // loop_header_branch
      %24 = sbr.rel (%p22) target = $region8
    $region5: #{tpu_custom_call.1} parent=1 // loop_body
      %s26 = ssub.s32 %s21, 1
      %s27 = ssub.s32 %s21, 2
      %s28 = sadd.s32 %s21, 1
      %s29 = ssub.s32 %s21, %s28
      %p30 = scmp.eq.s32.totalorder %s29, 0
      %s32 = sadd.s32 %s31, 1
      %s33 = scalar_select %p30, %s31, %s32
      %p36 = pneg %p30
      %p37 = scmp.eq.s32.totalorder %s21, 1
      %p38 = por %p36, %p37
      %p39 = scmp.ne.s32.totalorder %s31, %s34
      %p40 = scmp.eq.s32.totalorder %s21, 0
      %p41 = por %p39, %p40
      %p42 = scmp.ne.s32.totalorder %s31, %s34
      %p43 = scmp.eq.s32.totalorder %s26, 1
      %p44 = por %p42, %p43
      %p45 = scmp.ne.s32.totalorder %s34, %s35
      %p46 = scmp.eq.s32.totalorder %s26, 0
      %p47 = por %p45, %p46
      %p48 = scmp.ne.s32.totalorder %s34, %s35
      %p49 = scmp.eq.s32.totalorder %s27, 1
      %p50 = por %p48, %p49
      %p52 = scmp.ne.s32.totalorder %s35, %s51
      %p53 = scmp.eq.s32.totalorder %s27, 0
      %p54 = por %p52, %p53
      %s56 = sadd.s32 %s55, 1
      %p59 = scmp.eq.s32.totalorder %s21, 1
      %p60 = scmp.ne.s32.totalorder %s55, %s57
      %p61 = scmp.eq.s32.totalorder %s21, 0
      %p62 = por %p60, %p61
      %p63 = scmp.ne.s32.totalorder %s55, %s57
      %p64 = scmp.eq.s32.totalorder %s26, 1
      %p65 = por %p63, %p64
      %p66 = scmp.ne.s32.totalorder %s57, %s58
      %p67 = scmp.eq.s32.totalorder %s26, 0
      %p68 = por %p66, %p67
      %p69 = scmp.ne.s32.totalorder %s57, %s58
      %p70 = scmp.eq.s32.totalorder %s27, 1
      %p71 = por %p69, %p70
      %p73 = scmp.ne.s32.totalorder %s58, %s72
      %p74 = scmp.eq.s32.totalorder %s27, 0
      %p75 = por %p73, %p74
      %s77 = sadd.s32 %s76, 1
      %p80 = scmp.eq.s32.totalorder %s21, 1
      %p81 = scmp.ne.s32.totalorder %s76, %s78
      %p82 = scmp.eq.s32.totalorder %s21, 0
      %p83 = por %p81, %p82
      %p84 = scmp.ne.s32.totalorder %s76, %s78
      %p85 = scmp.eq.s32.totalorder %s26, 1
      %p86 = por %p84, %p85
      %p87 = scmp.ne.s32.totalorder %s78, %s79
      %p88 = scmp.eq.s32.totalorder %s26, 0
      %p89 = por %p87, %p88
      %p90 = scmp.ne.s32.totalorder %s78, %s79
      %p91 = scmp.eq.s32.totalorder %s27, 1
      %p92 = por %p90, %p91
      %p94 = scmp.ne.s32.totalorder %s79, %s93
      %p95 = scmp.eq.s32.totalorder %s27, 0
      %p96 = por %p94, %p95
      %s98 = sadd.s32 %s97, 1
      %p101 = scmp.eq.s32.totalorder %s21, 1
      %p102 = scmp.ne.s32.totalorder %s97, %s99
      %p103 = scmp.eq.s32.totalorder %s21, 0
      %p104 = por %p102, %p103
      %p105 = scmp.ne.s32.totalorder %s97, %s99
      %p106 = scmp.eq.s32.totalorder %s26, 1
      %p107 = por %p105, %p106
      %p108 = scmp.ne.s32.totalorder %s99, %s100
      %p109 = scmp.eq.s32.totalorder %s26, 0
      %p110 = por %p108, %p109
      %p111 = scmp.ne.s32.totalorder %s99, %s100
      %p112 = scmp.eq.s32.totalorder %s27, 1
      %p113 = por %p111, %p112
      %p115 = scmp.ne.s32.totalorder %s100, %s114
      %p116 = scmp.eq.s32.totalorder %s27, 0
      %p117 = por %p115, %p116
      %s119 = sadd.s32 %s118, 1
      %p122 = scmp.eq.s32.totalorder %s21, 1
      %p123 = scmp.ne.s32.totalorder %s118, %s120
      %p124 = scmp.eq.s32.totalorder %s21, 0
      %p125 = por %p123, %p124
      %p126 = scmp.ne.s32.totalorder %s118, %s120
      %p127 = scmp.eq.s32.totalorder %s26, 1
      %p128 = por %p126, %p127
      %p129 = scmp.ne.s32.totalorder %s120, %s121
      %p130 = scmp.eq.s32.totalorder %s26, 0
      %p131 = por %p129, %p130
      %p132 = scmp.ne.s32.totalorder %s120, %s121
      %p133 = scmp.eq.s32.totalorder %s27, 1
      %p134 = por %p132, %p133
      %p136 = scmp.ne.s32.totalorder %s121, %s135
      %p137 = scmp.eq.s32.totalorder %s27, 0
      %p138 = por %p136, %p137
      %s140 = sadd.s32 %s139, 1
      %p143 = scmp.eq.s32.totalorder %s21, 1
      %p144 = scmp.ne.s32.totalorder %s139, %s141
      %p145 = scmp.eq.s32.totalorder %s21, 0
      %p146 = por %p144, %p145
      %p147 = scmp.ne.s32.totalorder %s139, %s141
      %p148 = scmp.eq.s32.totalorder %s26, 1
      %p149 = por %p147, %p148
      %p150 = scmp.ne.s32.totalorder %s141, %s142
      %p151 = scmp.eq.s32.totalorder %s26, 0
      %p152 = por %p150, %p151
      %p153 = scmp.ne.s32.totalorder %s141, %s142
      %p154 = scmp.eq.s32.totalorder %s27, 1
      %p155 = por %p153, %p154
      %p157 = scmp.ne.s32.totalorder %s142, %s156
      %p158 = scmp.eq.s32.totalorder %s27, 0
      %p159 = por %p157, %p158
      %s161 = sadd.s32 %s160, 1
      %p164 = scmp.eq.s32.totalorder %s21, 1
      %p165 = scmp.ne.s32.totalorder %s160, %s162
      %p166 = scmp.eq.s32.totalorder %s21, 0
      %p167 = por %p165, %p166
      %p168 = scmp.ne.s32.totalorder %s160, %s162
      %p169 = scmp.eq.s32.totalorder %s26, 1
      %p170 = por %p168, %p169
      %p171 = scmp.ne.s32.totalorder %s162, %s163
      %p172 = scmp.eq.s32.totalorder %s26, 0
      %p173 = por %p171, %p172
      %p174 = scmp.ne.s32.totalorder %s162, %s163
      %p175 = scmp.eq.s32.totalorder %s27, 1
      %p176 = por %p174, %p175
      %p178 = scmp.ne.s32.totalorder %s163, %s177
      %p179 = scmp.eq.s32.totalorder %s27, 0
      %p180 = por %p178, %p179
      %s181 = ssub.s32 %s21, %s28
      %p182 = scmp.eq.s32.totalorder %s181, 0
      %s184 = sadd.s32 %s183, 1
      %s185 = scalar_select %p182, %s183, %s184
      %p188 = pneg %p182
      %p189 = scmp.eq.s32.totalorder %s21, 1
      %p190 = por %p188, %p189
      %p191 = scmp.ne.s32.totalorder %s183, %s186
      %p192 = scmp.eq.s32.totalorder %s21, 0
      %p193 = por %p191, %p192
      %p194 = scmp.ne.s32.totalorder %s183, %s186
      %p195 = scmp.eq.s32.totalorder %s26, 1
      %p196 = por %p194, %p195
      %p197 = scmp.ne.s32.totalorder %s186, %s187
      %p198 = scmp.eq.s32.totalorder %s26, 0
      %p199 = por %p197, %p198
      %p200 = scmp.ne.s32.totalorder %s186, %s187
      %p201 = scmp.eq.s32.totalorder %s27, 1
      %p202 = por %p200, %p201
      %p204 = scmp.ne.s32.totalorder %s187, %s203
      %p205 = scmp.eq.s32.totalorder %s27, 0
      %p206 = por %p204, %p205
      %p207 = scmp.le.s32.totalorder 1, %s21
      %p208 = scmp.lt.s32.totalorder %s21, 3
      %p209 = pnand %p207, %p208
      %p210 = pneg %p209
      // Predicated region
      $region9: #{tpu_custom_call.1} parent=5 // pred_check
        _
      $region10: #{tpu_custom_call.1} parent=5 // pred_check_branch
        %212 = sbr.rel (%p209) target = $region12
      $region11: #{tpu_custom_call.1} parent=5 // pred_region
        %s213 = ssub.s32 %s21, 1
        // Predicated region
        $region13: #{tpu_custom_call.1} parent=11 // pred_check
          %p214 = pneg %p68
        $region14: #{tpu_custom_call.1} parent=11 // pred_check_branch
          %216 = sbr.rel (%p214) target = $region16
        $region15: #{tpu_custom_call.1} parent=11 // pred_region
          %218 = vsyncadd [#allocation9], 0
          %s219 = sshll.u32 %s1, 4
          %s220 = int_to_ptr.hbm [resolvable:$true] %s219
          %s221 = sshll.u32 [#allocation8], 4
          %s222 = int_to_ptr.vmem [resolvable:$true] %s221
          %227 = dma.hbm_to_vmem [thread:$0]  %s220, 1536, %s222, [#allocation9], 64, 64, 4
        $region16: #{tpu_custom_call.1} parent=11 // pred_fallthru
          _
        // Predicated region
        $region17: #{tpu_custom_call.1} parent=11 // pred_check
          %p228 = pneg %p89
        $region18: #{tpu_custom_call.1} parent=11 // pred_check_branch
          %230 = sbr.rel (%p228) target = $region20
        $region19: #{tpu_custom_call.1} parent=11 // pred_region
          _
        $region20: #{tpu_custom_call.1} parent=11 // pred_fallthru
          _
        // Predicated region
        $region21: #{tpu_custom_call.1} parent=11 // pred_check
          %p231 = pneg %p110
        $region22: #{tpu_custom_call.1} parent=11 // pred_check_branch
          %233 = sbr.rel (%p231) target = $region24
        $region23: #{tpu_custom_call.1} parent=11 // pred_region
          %235 = vsyncadd [#allocation9], 0
          %s236 = sshll.u32 %s3, 4
          %s237 = int_to_ptr.hbm [resolvable:$true] %s236
          %s238 = sshll.u32 [#allocation10], 4
          %s239 = int_to_ptr.vmem [resolvable:$true] %s238
          %244 = dma.hbm_to_vmem [thread:$0]  %s237, 3072, %s239, [#allocation9], 64, 64, 4
        $region24: #{tpu_custom_call.1} parent=11 // pred_fallthru
          _
        // Predicated region
        $region25: #{tpu_custom_call.1} parent=11 // pred_check
          %p245 = pneg %p131
        $region26: #{tpu_custom_call.1} parent=11 // pred_check_branch
          %247 = sbr.rel (%p245) target = $region28
        $region27: #{tpu_custom_call.1} parent=11 // pred_region
          _
        $region28: #{tpu_custom_call.1} parent=11 // pred_fallthru
          _
        // Predicated region
        $region29: #{tpu_custom_call.1} parent=11 // pred_check
          %p248 = pneg %p152
        $region30: #{tpu_custom_call.1} parent=11 // pred_check_branch
          %250 = sbr.rel (%p248) target = $region32
        $region31: #{tpu_custom_call.1} parent=11 // pred_region
          %252 = vsyncadd [#allocation12], 0
          %s253 = sshll.u32 %s5, 4
          %s254 = int_to_ptr.hbm [resolvable:$true] %s253
          %s255 = sshll.u32 [#allocation11], 4
          %s256 = int_to_ptr.vmem [resolvable:$true] %s255
          %261 = dma.hbm_to_vmem [thread:$0]  %s254, 512, %s256, [#allocation12], 64, 64, 4
        $region32: #{tpu_custom_call.1} parent=11 // pred_fallthru
          _
        // Predicated region
        $region33: #{tpu_custom_call.1} parent=11 // pred_check
          %p262 = pneg %p173
        $region34: #{tpu_custom_call.1} parent=11 // pred_check_branch
          %264 = sbr.rel (%p262) target = $region36
        $region35: #{tpu_custom_call.1} parent=11 // pred_region
          _
        $region36: #{tpu_custom_call.1} parent=11 // pred_fallthru
          _
      $region12: #{tpu_custom_call.1} parent=5 // pred_fallthru
        _
      %p265 = scmp.lt.s32.totalorder %s21, 2
      // Predicated region
      $region37: #{tpu_custom_call.1} parent=5 // pred_check
        %p266 = pneg %p265
      $region38: #{tpu_custom_call.1} parent=5 // pred_check_branch
        %268 = sbr.rel (%p266) target = $region40
      $region39: #{tpu_custom_call.1} parent=5 // pred_region
        // Predicated region
        $region41: #{tpu_custom_call.1} parent=39 // pred_check
          %p269 = pneg %p41
        $region42: #{tpu_custom_call.1} parent=39 // pred_check_branch
          %271 = sbr.rel (%p269) target = $region44
        $region43: #{tpu_custom_call.1} parent=39 // pred_region
          %s272 = sand.u32 %s31, 1
          %s273 = scalar_lea.sflag [#allocation6], %s272
          %s274 = sand.u32 %s31, 1
          %s275 = smul.addr %s274, 32
          %s276 = scalar_lea.vmem [#allocation5], %s275
          %278 = vsyncadd %s273, 0
          %s279 = smul.addr %s21, 4
          %s280 = smul.addr %s279, 8
          %s281 = scalar_lea.hbm %s0, %s280
          %s282 = sshll.u32 %s281, 4
          %s283 = int_to_ptr.hbm [resolvable:$true] %s282
          %s284 = sshll.u32 %s276, 4
          %s285 = int_to_ptr.vmem [resolvable:$true] %s284
          %290 = dma.hbm_to_vmem [thread:$0]  %s283, 512, %s285, %s273, 128, 128, 8
        $region44: #{tpu_custom_call.1} parent=39 // pred_fallthru
          _
      $region40: #{tpu_custom_call.1} parent=5 // pred_fallthru
        _
      %p291 = scmp.le.s32.totalorder 1, %s21
      %p292 = scmp.lt.s32.totalorder %s21, 3
      %p293 = pnand %p291, %p292
      %p294 = pneg %p293
      // Predicated region
      $region45: #{tpu_custom_call.1} parent=5 // pred_check
        _
      $region46: #{tpu_custom_call.1} parent=5 // pred_check_branch
        %296 = sbr.rel (%p293) target = $region48
      $region47: #{tpu_custom_call.1} parent=5 // pred_region
        %s297 = ssub.s32 %s21, 1
        %s298 = sand.u32 %s34, 1
        %s299 = scalar_lea.sflag [#allocation6], %s298
        %s300 = sand.u32 %s34, 1
        %s301 = smul.addr %s300, 32
        %s302 = scalar_lea.vmem [#allocation5], %s301
        // Predicated region
        $region49: #{tpu_custom_call.1} parent=47 // pred_check
          %p303 = pneg %p47
        $region50: #{tpu_custom_call.1} parent=47 // pred_check_branch
          %305 = sbr.rel (%p303) target = $region52
        $region51: #{tpu_custom_call.1} parent=47 // pred_region
          %307 = dma.done %s299, 512
        $region52: #{tpu_custom_call.1} parent=47 // pred_fallthru
          _
        // Predicated region
        $region53: #{tpu_custom_call.1} parent=47 // pred_check
          %p308 = pneg %p68
        $region54: #{tpu_custom_call.1} parent=47 // pred_check_branch
          %310 = sbr.rel (%p308) target = $region56
        $region55: #{tpu_custom_call.1} parent=47 // pred_region
          %312 = dma.done [#allocation9], 1536
        $region56: #{tpu_custom_call.1} parent=47 // pred_fallthru
          _
        // Predicated region
        $region57: #{tpu_custom_call.1} parent=47 // pred_check
          %p313 = pneg %p110
        $region58: #{tpu_custom_call.1} parent=47 // pred_check_branch
          %315 = sbr.rel (%p313) target = $region60
        $region59: #{tpu_custom_call.1} parent=47 // pred_region
          %317 = dma.done [#allocation9], 3072
        $region60: #{tpu_custom_call.1} parent=47 // pred_fallthru
          _
        // Predicated region
        $region61: #{tpu_custom_call.1} parent=47 // pred_check
          %p318 = pneg %p152
        $region62: #{tpu_custom_call.1} parent=47 // pred_check_branch
          %320 = sbr.rel (%p318) target = $region64
        $region63: #{tpu_custom_call.1} parent=47 // pred_region
          %322 = dma.done [#allocation12], 512
        $region64: #{tpu_custom_call.1} parent=47 // pred_fallthru
          _
        %s323 = sand.u32 %s34, 1
        %s324 = scalar_lea.sflag [#allocation6], %s323
        %s325 = sand.u32 %s34, 1
        %s326 = smul.addr %s325, 32
        %s327 = scalar_lea.vmem [#allocation5], %s326
        %p328 = pneg %p47
        %p329 = pneg %p44
        %p330 = pneg %p68
        %p331 = pneg %p65
        %p332 = pneg %p89
        %p333 = pneg %p86
        %p334 = pneg %p110
        %p335 = pneg %p107
        %p336 = pneg %p131
        %p337 = pneg %p128
        %p338 = pneg %p152
        %p339 = pneg %p149
        %p340 = pneg %p173
        %p341 = pneg %p170
        %p342 = pneg %p199
        %p343 = pneg %p196
        %s344 = sand.u32 %s186, 1
        %s345 = scalar_lea.sflag [#allocation7], %s344
        %s346 = sand.u32 %s186, 1
        %s347 = smul.addr %s346, 16
        %s348 = scalar_lea.vmem [#allocation13], %s347
        %s350 = scalar_lea.vmem %s302, 1 [#allocation5]
        %v351 = vld [vmem:[%s350] ss:$2 sm:$0xff]
        %s352 = scalar_lea.vmem %s302, 17 [#allocation5]
        %v353 = vld [vmem:[%s352] ss:$2 sm:$0x7f]
        %vm356 = vcmask 1040384
        %v357 = vrot.slane %v351, 7
        %v358 = vrot.slane %v353, 7
        %v359 = vsel %vm356, %v357, %v358
        %v362 = vsel %vm356, 0.0, %v357
        %v363 = vpack.c.bf16 %v362, %v362
        %v364 = vpack.c.bf16 %v359, %v359
        %vm365 = vcmask 519168
        %366 = vst.msk [vmem:[#allocation2] sm:$0xf] %vm365, %v363
        %367 = vst.msk [vmem:[#allocation2 + $0x8] sm:$0xf] %vm365, %v364
        %v368 = vld [vmem:[%s302] ss:$2 sm:$0xff]
        %s369 = scalar_lea.vmem %s302, 16 [#allocation5]
        %v370 = vld [vmem:[%s369] ss:$2 sm:$0xff]
        %v371 = vpack.c.bf16 %v368, %v368
        %v372 = vpack.c.bf16 %v370, %v370
        %375 = vrot.lane.b32.xlu0 %v371, 64
        %v376 = vpop.permute.xlu0 %375
        %377 = vrot.lane.b32.xlu0 %v372, 64
        %v378 = vpop.permute.xlu0 %377
        %vm381 = vcmask 1043968
        %382 = vst.msk [vmem:[#allocation2] sm:$0xf] %vm381, %v376
        %383 = vst.msk [vmem:[#allocation2 + $0x8] sm:$0xf] %vm381, %v378
        %v384 = vld [vmem:[%s350] ss:$2 sm:$0xff]
        %v385 = vld [vmem:[%s352] ss:$2 sm:$0xff]
        %v386 = vpack.c.bf16 %v384, %v384
        %v387 = vpack.c.bf16 %v385, %v385
        %388 = vst.msk [vmem:[#allocation2 + $0x4] sm:$0xf] %vm365, %v386
        %389 = vst.msk [vmem:[#allocation2 + $0xc] sm:$0xf] %vm365, %v387
        %v390 = vld [vmem:[#allocation2] sm:$0xff]
        %v391 = vld [vmem:[#allocation2 + $0x8] sm:$0xff]
        %v392 = vld [vmem:[#allocation8] sm:$0xf]
        %v393 = vld [vmem:[#allocation8 + $0x4] sm:$0xf]
        %v394 = vld [vmem:[#allocation8 + $0x8] sm:$0xf]
        %v395 = vld [vmem:[#allocation8 + $0xc] sm:$0xf]
        %v396 = vld [vmem:[#allocation8 + $0x10] sm:$0xf]
        %v397 = vld [vmem:[#allocation8 + $0x14] sm:$0xf]
        %v398 = vld [vmem:[#allocation8 + $0x18] sm:$0xf]
        %v399 = vld [vmem:[#allocation8 + $0x1c] sm:$0xf]
        %v400 = vld [vmem:[#allocation8 + $0x20] sm:$0xf]
        %v401 = vld [vmem:[#allocation8 + $0x24] sm:$0xf]
        %v402 = vld [vmem:[#allocation8 + $0x28] sm:$0xf]
        %v403 = vld [vmem:[#allocation8 + $0x2c] sm:$0xf]
        %v404 = vld [vmem:[#allocation8 + $0x30] sm:$0xf]
        %v405 = vld [vmem:[#allocation8 + $0x34] sm:$0xf]
        %v406 = vld [vmem:[#allocation8 + $0x38] sm:$0xf]
        %v407 = vld [vmem:[#allocation8 + $0x3c] sm:$0xf]
        %v408 = vld [vmem:[#allocation8 + $0x40] sm:$0xf]
        %v409 = vld [vmem:[#allocation8 + $0x44] sm:$0xf]
        %v410 = vld [vmem:[#allocation8 + $0x48] sm:$0xf]
        %v411 = vld [vmem:[#allocation8 + $0x4c] sm:$0xf]
        %v412 = vld [vmem:[#allocation8 + $0x50] sm:$0xf]
        %v413 = vld [vmem:[#allocation8 + $0x54] sm:$0xf]
        %v414 = vld [vmem:[#allocation8 + $0x58] sm:$0xf]
        %v415 = vld [vmem:[#allocation8 + $0x5c] sm:$0xf]
        %v416 = vld [vmem:[%s2] sm:$0x1]
        %v418 = vperm.slane %v416, 0
        %v422 = vunpack.c.l.b16 %v390
        %v423 = vunpack.c.h.b16 %v390
        %v424 = vunpack.c.l.b16 %v391
        %v425 = vunpack.c.h.b16 %v391
        %v426 = vpack.c.b16 %v424, %v422
        %v427 = vpack.c.b16 %v425, %v423
        %v453 = vunpack.c.l.b16 %v392
        %v454 = vunpack.c.l.b16 %v393
        %v455 = vunpack.c.l.b16 %v394
        %v456 = vunpack.c.l.b16 %v395
        %v457 = vunpack.c.l.b16 %v396
        %v458 = vunpack.c.l.b16 %v397
        %v459 = vunpack.c.l.b16 %v398
        %v460 = vunpack.c.l.b16 %v399
        %v461 = vunpack.c.l.b16 %v400
        %v462 = vunpack.c.l.b16 %v401
        %v463 = vunpack.c.l.b16 %v402
        %v464 = vunpack.c.l.b16 %v403
        %v465 = vunpack.c.l.b16 %v404
        %v466 = vunpack.c.l.b16 %v405
        %v467 = vunpack.c.l.b16 %v406
        %v468 = vunpack.c.l.b16 %v407
        %v469 = vunpack.c.l.b16 %v408
        %v470 = vunpack.c.l.b16 %v409
        %v471 = vunpack.c.l.b16 %v410
        %v472 = vunpack.c.l.b16 %v411
        %v473 = vunpack.c.l.b16 %v412
        %v474 = vunpack.c.l.b16 %v413
        %v475 = vunpack.c.l.b16 %v414
        %v476 = vunpack.c.l.b16 %v415
        %v477 = vpack.c.b16 %v454, %v453
        %v478 = vpack.c.b16 %v456, %v455
        %v479 = vpack.c.b16 %v458, %v457
        %v480 = vpack.c.b16 %v460, %v459
        %v481 = vpack.c.b16 %v462, %v461
        %v482 = vpack.c.b16 %v464, %v463
        %v483 = vpack.c.b16 %v466, %v465
        %v484 = vpack.c.b16 %v468, %v467
        %v485 = vpack.c.b16 %v470, %v469
        %v486 = vpack.c.b16 %v472, %v471
        %v487 = vpack.c.b16 %v474, %v473
        %v488 = vpack.c.b16 %v476, %v475
        %vm501 = vcmask 523264
        %v503 = vsel %vm501, %v427, 0
        %505 = vmatpush.bf16.msra.mxu0 %v484
        %506 = vmatpush.bf16.msra.mxu0 %v483
        %507 = vmatpush.bf16.msra.mxu0 %v482
        %508 = vmatpush.bf16.msra.mxu0 %v481
        %509 = vmatpush.bf16.msra.mxu0 %v480
        %510 = vmatpush.bf16.msra.mxu0 %v479
        %511 = vmatpush.bf16.msra.mxu0 %v478
        %512 = vmatpush.bf16.msra.mxu0 %v477
        %513 = vmatmul.bf16.gmra.mxu0 %v426
        %v514 = vpop.f32.mrf.mxu0
        %v515 = vadd.f32 %v418, %v514
        %v516 = vpop.f32.mrf.mxu0
        %v517 = vadd.f32 %v418, %v516
        %518 = vdwg.mxu0
        %519 = vmatpush.bf16.msra.mxu0 0
        %520 = vmatpush.bf16.msra.mxu0 0
        %521 = vmatpush.bf16.msra.mxu0 0
        %522 = vmatpush.bf16.msra.mxu0 0
        %523 = vmatpush.bf16.msra.mxu0 %v488
        %524 = vmatpush.bf16.msra.mxu0 %v487
        %525 = vmatpush.bf16.msra.mxu0 %v486
        %526 = vmatpush.bf16.msra.mxu0 %v485
        %527 = vmatmul.bf16.gmra.mxu0 %v503
        %v528 = vpop.f32.mrf.mxu0
        %v529 = vadd.f32 %v515, %v528
        %v530 = vpop.f32.mrf.mxu0
        %v531 = vadd.f32 %v517, %v530
        %532 = vdwg.mxu0
        %v533 = vmax.f32 %v529, 0.0
        %v534 = vmax.f32 %v531, 0.0
        %535 = vst [vmem:[#allocation3] sm:$0xff] %v533
        %536 = vst [vmem:[#allocation3 + $0x8] sm:$0xff] %v534
        %v537 = vld [vmem:[#allocation3] sm:$0xff]
        %v538 = vld [vmem:[#allocation3 + $0x8] sm:$0xff]
        %v541 = vrot.slane %v537, 7
        %v542 = vrot.slane %v538, 7
        %v543 = vsel %vm356, %v541, %v542
        %v546 = vsel %vm356, 0.0, %v541
        %v547 = vpack.c.bf16 %v546, %v546
        %v548 = vpack.c.bf16 %v543, %v543
        %549 = vst [vmem:[#allocation4] sm:$0xf] %v547
        %550 = vst [vmem:[#allocation4 + $0xc] sm:$0xf] %v548
        %v551 = vpack.c.bf16 %v537, %v537
        %v552 = vpack.c.bf16 %v538, %v538
        %553 = vst [vmem:[#allocation4 + $0x4] sm:$0xf] %v551
        %554 = vst [vmem:[#allocation4 + $0x10] sm:$0xf] %v552
        %vm555 = vcmask 1046528
        %v556 = vrot.slane %v537, 1
        %v557 = vrot.slane %v538, 1
        %v558 = vsel %vm555, %v556, %v557
        %v561 = vsel %vm555, %v557, 0.0
        %v562 = vpack.c.bf16 %v558, %v558
        %v563 = vpack.c.bf16 %v561, %v561
        %564 = vst [vmem:[#allocation4 + $0x8] sm:$0xf] %v562
        %565 = vst [vmem:[#allocation4 + $0x14] sm:$0xf] %v563
        %v566 = vld [vmem:[#allocation4] sm:$0xff]
        %v567 = vld [vmem:[#allocation4 + $0x8] sm:$0xf]
        %v568 = vld [vmem:[#allocation4 + $0xc] sm:$0xff]
        %v569 = vld [vmem:[#allocation4 + $0x14] sm:$0xf]
        %v570 = vld [vmem:[#allocation10] sm:$0xf]
        %v571 = vld [vmem:[#allocation10 + $0x4] sm:$0xf]
        %v572 = vld [vmem:[#allocation10 + $0x8] sm:$0xf]
        %v573 = vld [vmem:[#allocation10 + $0xc] sm:$0xf]
        %v574 = vld [vmem:[#allocation10 + $0x10] sm:$0xf]
        %v575 = vld [vmem:[#allocation10 + $0x14] sm:$0xf]
        %v576 = vld [vmem:[#allocation10 + $0x18] sm:$0xf]
        %v577 = vld [vmem:[#allocation10 + $0x1c] sm:$0xf]
        %v578 = vld [vmem:[#allocation10 + $0x20] sm:$0xf]
        %v579 = vld [vmem:[#allocation10 + $0x24] sm:$0xf]
        %v580 = vld [vmem:[#allocation10 + $0x28] sm:$0xf]
        %v581 = vld [vmem:[#allocation10 + $0x2c] sm:$0xf]
        %v582 = vld [vmem:[#allocation10 + $0x30] sm:$0xf]
        %v583 = vld [vmem:[#allocation10 + $0x34] sm:$0xf]
        %v584 = vld [vmem:[#allocation10 + $0x38] sm:$0xf]
        %v585 = vld [vmem:[#allocation10 + $0x3c] sm:$0xf]
        %v586 = vld [vmem:[#allocation10 + $0x40] sm:$0xf]
        %v587 = vld [vmem:[#allocation10 + $0x44] sm:$0xf]
        %v588 = vld [vmem:[#allocation10 + $0x48] sm:$0xf]
        %v589 = vld [vmem:[#allocation10 + $0x4c] sm:$0xf]
        %v590 = vld [vmem:[#allocation10 + $0x50] sm:$0xf]
        %v591 = vld [vmem:[#allocation10 + $0x54] sm:$0xf]
        %v592 = vld [vmem:[#allocation10 + $0x58] sm:$0xf]
        %v593 = vld [vmem:[#allocation10 + $0x5c] sm:$0xf]
        %v594 = vld [vmem:[#allocation10 + $0x60] sm:$0xf]
        %v595 = vld [vmem:[#allocation10 + $0x64] sm:$0xf]
        %v596 = vld [vmem:[#allocation10 + $0x68] sm:$0xf]
        %v597 = vld [vmem:[#allocation10 + $0x6c] sm:$0xf]
        %v598 = vld [vmem:[#allocation10 + $0x70] sm:$0xf]
        %v599 = vld [vmem:[#allocation10 + $0x74] sm:$0xf]
        %v600 = vld [vmem:[#allocation10 + $0x78] sm:$0xf]
        %v601 = vld [vmem:[#allocation10 + $0x7c] sm:$0xf]
        %v602 = vld [vmem:[#allocation10 + $0x80] sm:$0xf]
        %v603 = vld [vmem:[#allocation10 + $0x84] sm:$0xf]
        %v604 = vld [vmem:[#allocation10 + $0x88] sm:$0xf]
        %v605 = vld [vmem:[#allocation10 + $0x8c] sm:$0xf]
        %v606 = vld [vmem:[#allocation10 + $0x90] sm:$0xf]
        %v607 = vld [vmem:[#allocation10 + $0x94] sm:$0xf]
        %v608 = vld [vmem:[#allocation10 + $0x98] sm:$0xf]
        %v609 = vld [vmem:[#allocation10 + $0x9c] sm:$0xf]
        %v610 = vld [vmem:[#allocation10 + $0xa0] sm:$0xf]
        %v611 = vld [vmem:[#allocation10 + $0xa4] sm:$0xf]
        %v612 = vld [vmem:[#allocation10 + $0xa8] sm:$0xf]
        %v613 = vld [vmem:[#allocation10 + $0xac] sm:$0xf]
        %v614 = vld [vmem:[#allocation10 + $0xb0] sm:$0xf]
        %v615 = vld [vmem:[#allocation10 + $0xb4] sm:$0xf]
        %v616 = vld [vmem:[#allocation10 + $0xb8] sm:$0xf]
        %v617 = vld [vmem:[#allocation10 + $0xbc] sm:$0xf]
        %v618 = vld [vmem:[%s4] sm:$0x1]
        %v620 = vperm.slane %v618, 0
        %v626 = vunpack.c.l.b16 %v566
        %v627 = vunpack.c.h.b16 %v566
        %v628 = vunpack.c.l.b16 %v567
        %v629 = vunpack.c.l.b16 %v568
        %v630 = vunpack.c.h.b16 %v568
        %v631 = vunpack.c.l.b16 %v569
        %v632 = vpack.c.b16 %v629, %v626
        %v633 = vpack.c.b16 %v630, %v627
        %v634 = vpack.c.b16 %v631, %v628
        %v686 = vunpack.c.l.b16 %v570
        %v687 = vunpack.c.l.b16 %v571
        %v688 = vunpack.c.l.b16 %v572
        %v689 = vunpack.c.l.b16 %v573
        %v690 = vunpack.c.l.b16 %v574
        %v691 = vunpack.c.l.b16 %v575
        %v692 = vunpack.c.l.b16 %v576
        %v693 = vunpack.c.l.b16 %v577
        %v694 = vunpack.c.l.b16 %v578
        %v695 = vunpack.c.l.b16 %v579
        %v696 = vunpack.c.l.b16 %v580
        %v697 = vunpack.c.l.b16 %v581
        %v698 = vunpack.c.l.b16 %v582
        %v699 = vunpack.c.l.b16 %v583
        %v700 = vunpack.c.l.b16 %v584
        %v701 = vunpack.c.l.b16 %v585
        %v702 = vunpack.c.l.b16 %v586
        %v703 = vunpack.c.l.b16 %v587
        %v704 = vunpack.c.l.b16 %v588
        %v705 = vunpack.c.l.b16 %v589
        %v706 = vunpack.c.l.b16 %v590
        %v707 = vunpack.c.l.b16 %v591
        %v708 = vunpack.c.l.b16 %v592
        %v709 = vunpack.c.l.b16 %v593
        %v710 = vunpack.c.l.b16 %v594
        %v711 = vunpack.c.l.b16 %v595
        %v712 = vunpack.c.l.b16 %v596
        %v713 = vunpack.c.l.b16 %v597
        %v714 = vunpack.c.l.b16 %v598
        %v715 = vunpack.c.l.b16 %v599
        %v716 = vunpack.c.l.b16 %v600
        %v717 = vunpack.c.l.b16 %v601
        %v718 = vunpack.c.l.b16 %v602
        %v719 = vunpack.c.l.b16 %v603
        %v720 = vunpack.c.l.b16 %v604
        %v721 = vunpack.c.l.b16 %v605
        %v722 = vunpack.c.l.b16 %v606
        %v723 = vunpack.c.l.b16 %v607
        %v724 = vunpack.c.l.b16 %v608
        %v725 = vunpack.c.l.b16 %v609
        %v726 = vunpack.c.l.b16 %v610
        %v727 = vunpack.c.l.b16 %v611
        %v728 = vunpack.c.l.b16 %v612
        %v729 = vunpack.c.l.b16 %v613
        %v730 = vunpack.c.l.b16 %v614
        %v731 = vunpack.c.l.b16 %v615
        %v732 = vunpack.c.l.b16 %v616
        %v733 = vunpack.c.l.b16 %v617
        %v734 = vpack.c.b16 %v687, %v686
        %v735 = vpack.c.b16 %v689, %v688
        %v736 = vpack.c.b16 %v691, %v690
        %v737 = vpack.c.b16 %v693, %v692
        %v738 = vpack.c.b16 %v695, %v694
        %v739 = vpack.c.b16 %v697, %v696
        %v740 = vpack.c.b16 %v699, %v698
        %v741 = vpack.c.b16 %v701, %v700
        %v742 = vpack.c.b16 %v703, %v702
        %v743 = vpack.c.b16 %v705, %v704
        %v744 = vpack.c.b16 %v707, %v706
        %v745 = vpack.c.b16 %v709, %v708
        %v746 = vpack.c.b16 %v711, %v710
        %v747 = vpack.c.b16 %v713, %v712
        %v748 = vpack.c.b16 %v715, %v714
        %v749 = vpack.c.b16 %v717, %v716
        %v750 = vpack.c.b16 %v719, %v718
        %v751 = vpack.c.b16 %v721, %v720
        %v752 = vpack.c.b16 %v723, %v722
        %v753 = vpack.c.b16 %v725, %v724
        %v754 = vpack.c.b16 %v727, %v726
        %v755 = vpack.c.b16 %v729, %v728
        %v756 = vpack.c.b16 %v731, %v730
        %v757 = vpack.c.b16 %v733, %v732
        %782 = vmatpush.bf16.msra.mxu0 %v741
        %783 = vmatpush.bf16.msra.mxu0 %v740
        %784 = vmatpush.bf16.msra.mxu0 %v739
        %785 = vmatpush.bf16.msra.mxu0 %v738
        %786 = vmatpush.bf16.msra.mxu0 %v737
        %787 = vmatpush.bf16.msra.mxu0 %v736
        %788 = vmatpush.bf16.msra.mxu0 %v735
        %789 = vmatpush.bf16.msra.mxu0 %v734
        %790 = vmatmul.bf16.gmra.mxu0 %v632
        %v791 = vpop.f32.mrf.mxu0
        %v792 = vadd.f32 %v620, %v791
        %v793 = vpop.f32.mrf.mxu0
        %v794 = vadd.f32 %v620, %v793
        %795 = vdwg.mxu0
        %796 = vmatpush.bf16.msra.mxu0 %v749
        %797 = vmatpush.bf16.msra.mxu0 %v748
        %798 = vmatpush.bf16.msra.mxu0 %v747
        %799 = vmatpush.bf16.msra.mxu0 %v746
        %800 = vmatpush.bf16.msra.mxu0 %v745
        %801 = vmatpush.bf16.msra.mxu0 %v744
        %802 = vmatpush.bf16.msra.mxu0 %v743
        %803 = vmatpush.bf16.msra.mxu0 %v742
        %804 = vmatmul.bf16.gmra.mxu0 %v633
        %v805 = vpop.f32.mrf.mxu0
        %v806 = vadd.f32 %v792, %v805
        %v807 = vpop.f32.mrf.mxu0
        %v808 = vadd.f32 %v794, %v807
        %809 = vdwg.mxu0
        %810 = vmatpush.bf16.msra.mxu0 %v757
        %811 = vmatpush.bf16.msra.mxu0 %v756
        %812 = vmatpush.bf16.msra.mxu0 %v755
        %813 = vmatpush.bf16.msra.mxu0 %v754
        %814 = vmatpush.bf16.msra.mxu0 %v753
        %815 = vmatpush.bf16.msra.mxu0 %v752
        %816 = vmatpush.bf16.msra.mxu0 %v751
        %817 = vmatpush.bf16.msra.mxu0 %v750
        %818 = vmatmul.bf16.gmra.mxu0 %v634
        %v819 = vpop.f32.mrf.mxu0
        %v820 = vadd.f32 %v806, %v819
        %v821 = vpop.f32.mrf.mxu0
        %v822 = vadd.f32 %v808, %v821
        %823 = vdwg.mxu0
        %v824 = vld [vmem:[%s302] ss:$2 sm:$0xff]
        %v825 = vld [vmem:[%s369] ss:$2 sm:$0xff]
        %v826 = vpack.c.bf16 %v825, %v824
        %v827 = vld [vmem:[#allocation11] sm:$0xf]
        %v828 = vld [vmem:[#allocation11 + $0x4] sm:$0xf]
        %v829 = vld [vmem:[#allocation11 + $0x8] sm:$0xf]
        %v830 = vld [vmem:[#allocation11 + $0xc] sm:$0xf]
        %v831 = vld [vmem:[#allocation11 + $0x10] sm:$0xf]
        %v832 = vld [vmem:[#allocation11 + $0x14] sm:$0xf]
        %v833 = vld [vmem:[#allocation11 + $0x18] sm:$0xf]
        %v834 = vld [vmem:[#allocation11 + $0x1c] sm:$0xf]
        %v835 = vld [vmem:[%s6] sm:$0x1]
        %v837 = vperm.slane %v835, 0
        %v847 = vunpack.c.l.b16 %v827
        %v848 = vunpack.c.l.b16 %v828
        %v849 = vunpack.c.l.b16 %v829
        %v850 = vunpack.c.l.b16 %v830
        %v851 = vunpack.c.l.b16 %v831
        %v852 = vunpack.c.l.b16 %v832
        %v853 = vunpack.c.l.b16 %v833
        %v854 = vunpack.c.l.b16 %v834
        %v855 = vpack.c.b16 %v848, %v847
        %v856 = vpack.c.b16 %v850, %v849
        %v857 = vpack.c.b16 %v852, %v851
        %v858 = vpack.c.b16 %v854, %v853
        %v864 = vsel %vm501, %v826, 0
        %866 = vmatpush.bf16.msra.mxu0 0
        %867 = vmatpush.bf16.msra.mxu0 0
        %868 = vmatpush.bf16.msra.mxu0 0
        %869 = vmatpush.bf16.msra.mxu0 0
        %870 = vmatpush.bf16.msra.mxu0 %v858
        %871 = vmatpush.bf16.msra.mxu0 %v857
        %872 = vmatpush.bf16.msra.mxu0 %v856
        %873 = vmatpush.bf16.msra.mxu0 %v855
        %874 = vmatmul.bf16.gmra.mxu0 %v864
        %v875 = vpop.f32.mrf.mxu0
        %v876 = vadd.f32 %v837, %v875
        %v877 = vpop.f32.mrf.mxu0
        %v878 = vadd.f32 %v837, %v877
        %879 = vdwg.mxu0
        %v880 = vadd.f32 %v820, %v876
        %v881 = vadd.f32 %v822, %v878
        %v882 = vmax.f32 %v880, 0.0
        %v883 = vmax.f32 %v881, 0.0
        %884 = vst [vmem:[%s348] sm:$0xff] %v882
        %885 = vst [vmem:[%s348 + $0x8] sm:$0xff] %v883
        %s886 = sand.u32 %s186, 1
        %s887 = scalar_lea.sflag [#allocation7], %s886
        %s888 = sand.u32 %s186, 1
        %s889 = smul.addr %s888, 16
        %s890 = scalar_lea.vmem [#allocation13], %s889
        // Predicated region
        $region65: #{tpu_custom_call.1} parent=47 // pred_check
          %p891 = pneg %p196
        $region66: #{tpu_custom_call.1} parent=47 // pred_check_branch
          %893 = sbr.rel (%p891) target = $region68
        $region67: #{tpu_custom_call.1} parent=47 // pred_region
          %895 = vsyncadd %s887, 0
          %s896 = smul.addr %s26, 2
          %s897 = smul.addr %s896, 8
          %s898 = scalar_lea.hbm %s7, %s897
          %s899 = sshll.u32 %s890, 4
          %s900 = int_to_ptr.vmem [resolvable:$true] %s899
          %s901 = sshll.u32 %s898, 4
          %s902 = int_to_ptr.hbm [resolvable:$true] %s901
          %907 = dma.vmem_to_hbm [thread:$0]  %s900, 256, %s902, %s887, 128, 128, 8
        $region68: #{tpu_custom_call.1} parent=47 // pred_fallthru
          _
      $region48: #{tpu_custom_call.1} parent=5 // pred_fallthru
        _
      %p908 = scmp.le.s32.totalorder 2, %s21
      // Predicated region
      $region69: #{tpu_custom_call.1} parent=5 // pred_check
        %p909 = pneg %p908
      $region70: #{tpu_custom_call.1} parent=5 // pred_check_branch
        %911 = sbr.rel (%p909) target = $region72
      $region71: #{tpu_custom_call.1} parent=5 // pred_region
        %s912 = ssub.s32 %s21, 2
        // Predicated region
        $region73: #{tpu_custom_call.1} parent=71 // pred_check
          %p913 = pneg %p202
        $region74: #{tpu_custom_call.1} parent=71 // pred_check_branch
          %915 = sbr.rel (%p913) target = $region76
        $region75: #{tpu_custom_call.1} parent=71 // pred_region
          %s916 = sand.u32 %s187, 1
          %s917 = scalar_lea.sflag [#allocation7], %s916
          %s918 = sand.u32 %s187, 1
          %s919 = smul.addr %s918, 16
          %s920 = scalar_lea.vmem [#allocation13], %s919
          %922 = dma.done %s917, 256
        $region76: #{tpu_custom_call.1} parent=71 // pred_fallthru
          _
      $region72: #{tpu_custom_call.1} parent=5 // pred_fallthru
        _
    $region6: #{tpu_custom_call.1} parent=1 // loop_footer
      %s25 = sadd.s32 1, %s21
    $region7: #{tpu_custom_call.1} parent=1 // loop_footer_branch
      %20 = sbr.rel target = $region3
    $region8: #{tpu_custom_call.1} parent=1 // loop_exit
      _
    %923 = vsyncpa [#allocation6], 1
    %s924 = scalar_lea.sflag [#allocation6], 1
    %925 = vsyncpa %s924, 1
    %926 = vsyncpa [#allocation9], 1
    %927 = vsyncpa [#allocation12], 1
    %928 = vsyncpa [#allocation7], 1
    %s929 = scalar_lea.sflag [#allocation7], 1
    %930 = vsyncpa %s929, 1

</llo_original>
